<compile_context>
chip_gen: v6e
topology: v6e:2x2x1
jax: 0.10.0
libtpu: 0.0.40
codegen_flags: <defaults>
</compile_context>

<pallas_src>
import jax
import jax.numpy as jnp
from jax import lax
from jax.experimental import pallas as pl
from jax.experimental.pallas import tpu as pltpu


_TAPS = tuple((dh, dw) for dh in range(3) for dw in range(3))
_CENTER = 4  # index of the (dh=1, dw=1) tap in _TAPS


def _make_kernel(H, W, Cout, Cout_p, block_b):
    HW = H * W
    n = Cout * HW                       # real element count per sample
    inv_n = 1.0 / n
    inv_nm1 = 1.0 / (n - 1)
    pad_rows = Cout_p - Cout            # zero-padded output channels

    def kernel(x_ref, w_ref, b_ref, mask_ref, o_ref):
        # x_ref:    (block_b, Cin, HW)     inputs, flat spatial on lanes (NCHW)
        # w_ref:    (9*Cout_p, Cin)        tap-stacked conv weights (zero pad)
        # b_ref:    (Cout_p, 1)            conv bias (zero padded)
        # mask_ref: (9, 1, HW)             0/1 tap-validity masks (padding=1)
        # o_ref:    (block_b, Cout_p, HW)  normalized + ReLU'd output (NCHW)
        w_all = w_ref[...]               # loop-invariant, hoisted
        bias = b_ref[...]

        def body(b, carry):
            x_b = x_ref[b]                                        # (Cin, HW)

            # One MXU push per sample: all 9 taps' contributions at once.
            # t_all[t*Cout_p + co, p] = sum_ci w[dh,dw,ci,co] * x[ci, p]
            t_all = jnp.dot(w_all, x_b, preferred_element_type=jnp.float32)

            # Conv accumulation: shift each tap slab along the flat spatial
            # (lane) axis on the XLU and zero the invalid border pixels with
            # the precomputed masks (this implements padding=1).
            acc = t_all[_CENTER * Cout_p:(_CENTER + 1) * Cout_p, :] + bias
            for t, (dh, dw) in enumerate(_TAPS):
                if t == _CENTER:
                    continue
                shift = (dh - 1) * W + (dw - 1)      # flat-index offset of tap
                slab = t_all[t * Cout_p:(t + 1) * Cout_p, :]   # 8-sublane aligned
                slab = pltpu.roll(slab, shift=(-shift) % HW, axis=1)
                acc = acc + slab * mask_ref[t]

            # Per-sample mean / unbiased std (torch.std, no epsilon), two-pass.
            # Zero-padded channel rows are exactly 0, so they add nothing to
            # the raw sum; after centering each contributes mean^2, removed
            # exactly below.
            mean = jnp.sum(acc) * inv_n
            d = acc - mean
            ss = jnp.sum(d * d)
            if pad_rows:
                ss = ss - float(pad_rows * HW) * mean * mean
            inv_std = lax.rsqrt(ss * inv_nm1)        # EUP; no epsilon
            o_ref[b] = jnp.maximum(d * inv_std, 0.0).astype(o_ref.dtype)
            return carry

        lax.fori_loop(0, block_b, body, 0)

    return kernel


def _device_info():
    """(vmem_capacity_bytes, num_tensorcores) with safe fallbacks."""
    try:
        vmem_cap = int(pltpu.get_tpu_info().vmem_capacity_bytes)
        if vmem_cap <= 0:
            raise ValueError("bad vmem capacity")
    except Exception:
        vmem_cap = 64 << 20            # v7x physical: smallest current gen
    try:
        kind = jax.devices()[0].device_kind.lower()
    except Exception:
        kind = ""
    multi_tc = any(tag in kind for tag in ("v7", "7x", "v5p", "v4"))
    return vmem_cap, (2 if multi_tc else 1)


def _pick_block(N, Cin, Cout_p, HW):
    """Samples per grid step + scoped-VMEM request.

    HBM-bound kernel -> take the largest block the per-generation VMEM budget
    allows (double-buffered x/out blocks + one live sample's intermediates +
    headroom).  Only on multi-TensorCore chips do we force >= 2 grid blocks.
    """
    vmem_cap, num_tc = _device_info()
    vmem_limit = max(32 << 20, min((vmem_cap * 3) // 4, 100 << 20))

    io_per_sample = (Cin + Cout_p) * HW * 4       # x + out rows per sample, f32
    live_bytes = 12 * Cout_p * HW * 4             # t_all + acc + transients
    headroom = 4 << 20
    budget = max(2 * io_per_sample, vmem_limit - live_bytes - headroom)
    cap = max(1, budget // (2 * io_per_sample))   # 2x: double-buffered blocks

    block_b = int(min(N, cap))
    if num_tc >= 2 and N >= 2 and block_b >= N:
        block_b = (N + 1) // 2                    # feed both TensorCores
    return max(1, block_b), int(vmem_limit)


@jax.jit
def bn_conv2d_relu(x_nchw, w_hwio, bias):
    """x_nchw: (N, Cin, H, W) f32; w_hwio: (3, 3, Cin, Cout); bias: (Cout,)."""
    N, Cin, H, W = x_nchw.shape
    Cout = w_hwio.shape[-1]
    HW = H * W
    Cout_p = -(-Cout // 8) * 8          # sublane-align the tap slabs

    block_b, vmem_limit = _pick_block(N, Cin, Cout_p, HW)
    n_blocks = pl.cdiv(N, block_b)
    N_pad = n_blocks * block_b

    # ---- glue: free reshape of x (contiguous); tiny weight shuffle; no
    # transpose and no spatial padding of the activations.
    x_flat = x_nchw.reshape(N, Cin, HW)
    if N_pad != N:
        x_flat = jnp.pad(x_flat, ((0, N_pad - N), (0, 0), (0, 0)))

    # (3,3,Cin,Cout) -> per-tap (Cout_p, Cin), stacked along M (zero padded).
    w_t = jnp.transpose(w_hwio, (0, 1, 3, 2)).reshape(9, Cout, Cin)
    if Cout_p != Cout:
        w_t = jnp.pad(w_t, ((0, 0), (0, Cout_p - Cout), (0, 0)))
    w_all = w_t.reshape(9 * Cout_p, Cin)
    b_p = jnp.pad(bias, (0, Cout_p - Cout)).reshape(Cout_p, 1)

    # 0/1 validity of each tap at every output pixel (implements padding=1);
    # depends only on static shapes -> constant-folded under jit, ~9*HW*4 B,
    # DMA'd once (constant block index) and resident across the grid.
    r = jnp.repeat(jnp.arange(H, dtype=jnp.int32), W)       # output-pixel row
    c = jnp.tile(jnp.arange(W, dtype=jnp.int32), H)         # output-pixel col
    masks = []
    for dh, dw in _TAPS:
        ok = ((r + (dh - 1) >= 0) & (r + (dh - 1) < H) &
              (c + (dw - 1) >= 0) & (c + (dw - 1) < W))
        masks.append(ok)
    mask_arr = jnp.stack(masks).astype(jnp.float32).reshape(9, 1, HW)

    out_dtype = jnp.float32   # flip to bf16 to cut HBM traffic if acceptable

    out_flat = pl.pallas_call(
        _make_kernel(H, W, Cout, Cout_p, block_b),
        out_shape=jax.ShapeDtypeStruct((N_pad, Cout_p, HW), out_dtype),
        grid_spec=pltpu.PrefetchScalarGridSpec(
            num_scalar_prefetch=0,
            grid=(n_blocks,),
            in_specs=[
                pl.BlockSpec((block_b, Cin, HW), lambda i: (i, 0, 0)),
                pl.BlockSpec((9 * Cout_p, Cin), lambda i: (0, 0)),
                pl.BlockSpec((Cout_p, 1), lambda i: (0, 0)),
                pl.BlockSpec((9, 1, HW), lambda i: (0, 0, 0)),
            ],
            out_specs=pl.BlockSpec((block_b, Cout_p, HW), lambda i: (i, 0, 0)),
        ),
        compiler_params=pltpu.CompilerParams(
            dimension_semantics=("parallel",),
            vmem_limit_bytes=vmem_limit,
        ),
    )(x_flat, w_all, b_p, mask_arr)

    # Output is already (N_pad, Cout_p, H*W) == padded NCHW: drop the padding
    # (a no-op slice when N, Cout are already aligned) and reshape for free.
    return out_flat[:N, :Cout].reshape(N, Cout, H, W)


def _reference(x_nchw, w_hwio, bias):
    """Pure-JAX reference mirroring the PyTorch forward (sanity check)."""
    y = lax.conv_general_dilated(
        x_nchw, w_hwio,
        window_strides=(1, 1), padding=((1, 1), (1, 1)),
        dimension_numbers=("NCHW", "HWIO", "NCHW"),
    ) + bias[None, :, None, None]
    mean = jnp.mean(y, axis=(1, 2, 3), keepdims=True)
    std = jnp.std(y, axis=(1, 2, 3), keepdims=True, ddof=1)  # torch.std (unbiased)
    return jnp.maximum((y - mean) / std, 0.0)


if __name__ == "__main__":
    N, Cin, Cout, H, W = 2, 4, 8, 16, 16

    key = jax.random.PRNGKey(0)
    kx, kw, kb = jax.random.split(key, 3)

    x = jax.random.normal(kx, (N, Cin, H, W), dtype=jnp.float32)
    # deterministic synthetic Conv2d(in=4, out=8, k=3, pad=1) params
    fan_in = Cin * 3 * 3
    bound = 1.0 / (fan_in ** 0.5)
    w = jax.random.uniform(kw, (3, 3, Cin, Cout), jnp.float32, -bound, bound)
    b = jax.random.uniform(kb, (Cout,), jnp.float32, -bound, bound)

    out = jax.block_until_ready(bn_conv2d_relu(x, w, b))
    assert out.shape == (N, Cout, H, W)

    ref = _reference(x, w, b)
    err = float(jnp.max(jnp.abs(out - ref)))
    assert jnp.allclose(out, ref, atol=2e-4, rtol=2e-4), err

    print("KERNEL_OK")
</pallas_src>

<mosaic_0001>
module attributes {stable_mosaic.version = 11 : i64} {
  func.func @kernel(%arg0: i32, %arg1: memref<2x4x256xf32, #tpu.memory_space<vmem>>, %arg2: memref<72x4xf32, #tpu.memory_space<vmem>>, %arg3: memref<8x1xf32, #tpu.memory_space<vmem>>, %arg4: memref<9x1x256xf32, #tpu.memory_space<vmem>>, %arg5: memref<2x8x256xf32, #tpu.memory_space<vmem>>) attributes {dimension_semantics = [#tpu.dimension_semantics<parallel>], iteration_bounds = array<i64: 1>, scalar_prefetch = 0 : i64, scratch_operands = 0 : i64, tpu.core_type = #tpu.core_type<tc>, window_params = [{transform_indices = @transform_0, window_bounds = array<i64: 2, 4, 256>}, {pipeline_mode = #tpu.pipeline_mode<synchronous>, transform_indices = @transform_1, window_bounds = array<i64: 72, 4>}, {pipeline_mode = #tpu.pipeline_mode<synchronous>, transform_indices = @transform_2, window_bounds = array<i64: 8, 1>}, {pipeline_mode = #tpu.pipeline_mode<synchronous>, transform_indices = @transform_3, window_bounds = array<i64: 9, 1, 256>}, {transform_indices = @transform_4, window_bounds = array<i64: 2, 8, 256>}]} {
    %c0 = arith.constant 0 : index
    %c0_0 = arith.constant 0 : index
    %0 = vector.load %arg2[%c0, %c0_0] : memref<72x4xf32, #tpu.memory_space<vmem>>, vector<72x4xf32>
    %c0_1 = arith.constant 0 : index
    %c0_2 = arith.constant 0 : index
    %1 = vector.load %arg3[%c0_1, %c0_2] : memref<8x1xf32, #tpu.memory_space<vmem>>, vector<8x1xf32>
    %c0_i32 = arith.constant 0 : i32
    %c2_i32 = arith.constant 2 : i32
    %2 = arith.addi %c0_i32, %c2_i32 : i32
    %c1_i32 = arith.constant 1 : i32
    scf.for %arg6 = %c0_i32 to %2 step %c1_i32  : i32 {
      %3 = arith.index_cast %arg6 : i32 to index
      %c0_4 = arith.constant 0 : index
      %c0_5 = arith.constant 0 : index
      %4 = vector.load %arg1[%3, %c0_4, %c0_5] : memref<2x4x256xf32, #tpu.memory_space<vmem>>, vector<1x4x256xf32>
      %5 = vector.shape_cast %4 : vector<1x4x256xf32> to vector<4x256xf32>
      %cst = arith.constant dense<0.000000e+00> : vector<72x256xf32>
      %6 = tpu.matmul %0, %5, %cst {dimension_numbers = #tpu.dot_dimension_numbers<[1], [0], [0], [1], [0, 0, 1, 1], [], []>} : vector<72x4xf32>, vector<4x256xf32>, vector<72x256xf32> -> vector<72x256xf32>
      %7 = vector.extract_strided_slice %6 {offsets = [32, 0], sizes = [8, 256], strides = [1, 1]} : vector<72x256xf32> to vector<8x256xf32>
      %8 = vector.broadcast %1 : vector<8x1xf32> to vector<8x256xf32>
      %9 = arith.addf %7, %8 : vector<8x256xf32>
      %10 = vector.extract_strided_slice %6 {offsets = [0, 0], sizes = [8, 256], strides = [1, 1]} : vector<72x256xf32> to vector<8x256xf32>
      %c17_i32 = arith.constant 17 : i32
      %11 = tpu.dynamic_rotate %10 by %c17_i32 dim 1 : vector<8x256xf32>, i32 -> vector<8x256xf32>
      %c0_6 = arith.constant 0 : index
      %c0_7 = arith.constant 0 : index
      %c0_8 = arith.constant 0 : index
      %12 = vector.load %arg4[%c0_6, %c0_7, %c0_8] : memref<9x1x256xf32, #tpu.memory_space<vmem>>, vector<1x1x256xf32>
      %13 = vector.shape_cast %12 : vector<1x1x256xf32> to vector<1x256xf32>
      %14 = vector.broadcast %13 : vector<1x256xf32> to vector<8x256xf32>
      %15 = arith.mulf %11, %14 : vector<8x256xf32>
      %16 = arith.addf %9, %15 : vector<8x256xf32>
      %17 = vector.extract_strided_slice %6 {offsets = [8, 0], sizes = [8, 256], strides = [1, 1]} : vector<72x256xf32> to vector<8x256xf32>
      %c16_i32 = arith.constant 16 : i32
      %18 = tpu.dynamic_rotate %17 by %c16_i32 dim 1 : vector<8x256xf32>, i32 -> vector<8x256xf32>
      %c1 = arith.constant 1 : index
      %c0_9 = arith.constant 0 : index
      %c0_10 = arith.constant 0 : index
      %19 = vector.load %arg4[%c1, %c0_9, %c0_10] : memref<9x1x256xf32, #tpu.memory_space<vmem>>, vector<1x1x256xf32>
      %20 = vector.shape_cast %19 : vector<1x1x256xf32> to vector<1x256xf32>
      %21 = vector.broadcast %20 : vector<1x256xf32> to vector<8x256xf32>
      %22 = arith.mulf %18, %21 : vector<8x256xf32>
      %23 = arith.addf %16, %22 : vector<8x256xf32>
      %24 = vector.extract_strided_slice %6 {offsets = [16, 0], sizes = [8, 256], strides = [1, 1]} : vector<72x256xf32> to vector<8x256xf32>
      %c15_i32 = arith.constant 15 : i32
      %25 = tpu.dynamic_rotate %24 by %c15_i32 dim 1 : vector<8x256xf32>, i32 -> vector<8x256xf32>
      %c2 = arith.constant 2 : index
      %c0_11 = arith.constant 0 : index
      %c0_12 = arith.constant 0 : index
      %26 = vector.load %arg4[%c2, %c0_11, %c0_12] : memref<9x1x256xf32, #tpu.memory_space<vmem>>, vector<1x1x256xf32>
      %27 = vector.shape_cast %26 : vector<1x1x256xf32> to vector<1x256xf32>
      %28 = vector.broadcast %27 : vector<1x256xf32> to vector<8x256xf32>
      %29 = arith.mulf %25, %28 : vector<8x256xf32>
      %30 = arith.addf %23, %29 : vector<8x256xf32>
      %31 = vector.extract_strided_slice %6 {offsets = [24, 0], sizes = [8, 256], strides = [1, 1]} : vector<72x256xf32> to vector<8x256xf32>
      %c1_i32_13 = arith.constant 1 : i32
      %32 = tpu.dynamic_rotate %31 by %c1_i32_13 dim 1 : vector<8x256xf32>, i32 -> vector<8x256xf32>
      %c3 = arith.constant 3 : index
      %c0_14 = arith.constant 0 : index
      %c0_15 = arith.constant 0 : index
      %33 = vector.load %arg4[%c3, %c0_14, %c0_15] : memref<9x1x256xf32, #tpu.memory_space<vmem>>, vector<1x1x256xf32>
      %34 = vector.shape_cast %33 : vector<1x1x256xf32> to vector<1x256xf32>
      %35 = vector.broadcast %34 : vector<1x256xf32> to vector<8x256xf32>
      %36 = arith.mulf %32, %35 : vector<8x256xf32>
      %37 = arith.addf %30, %36 : vector<8x256xf32>
      %38 = vector.extract_strided_slice %6 {offsets = [40, 0], sizes = [8, 256], strides = [1, 1]} : vector<72x256xf32> to vector<8x256xf32>
      %c255_i32 = arith.constant 255 : i32
      %39 = tpu.dynamic_rotate %38 by %c255_i32 dim 1 : vector<8x256xf32>, i32 -> vector<8x256xf32>
      %c5 = arith.constant 5 : index
      %c0_16 = arith.constant 0 : index
      %c0_17 = arith.constant 0 : index
      %40 = vector.load %arg4[%c5, %c0_16, %c0_17] : memref<9x1x256xf32, #tpu.memory_space<vmem>>, vector<1x1x256xf32>
      %41 = vector.shape_cast %40 : vector<1x1x256xf32> to vector<1x256xf32>
      %42 = vector.broadcast %41 : vector<1x256xf32> to vector<8x256xf32>
      %43 = arith.mulf %39, %42 : vector<8x256xf32>
      %44 = arith.addf %37, %43 : vector<8x256xf32>
      %45 = vector.extract_strided_slice %6 {offsets = [48, 0], sizes = [8, 256], strides = [1, 1]} : vector<72x256xf32> to vector<8x256xf32>
      %c241_i32 = arith.constant 241 : i32
      %46 = tpu.dynamic_rotate %45 by %c241_i32 dim 1 : vector<8x256xf32>, i32 -> vector<8x256xf32>
      %c6 = arith.constant 6 : index
      %c0_18 = arith.constant 0 : index
      %c0_19 = arith.constant 0 : index
      %47 = vector.load %arg4[%c6, %c0_18, %c0_19] : memref<9x1x256xf32, #tpu.memory_space<vmem>>, vector<1x1x256xf32>
      %48 = vector.shape_cast %47 : vector<1x1x256xf32> to vector<1x256xf32>
      %49 = vector.broadcast %48 : vector<1x256xf32> to vector<8x256xf32>
      %50 = arith.mulf %46, %49 : vector<8x256xf32>
      %51 = arith.addf %44, %50 : vector<8x256xf32>
      %52 = vector.extract_strided_slice %6 {offsets = [56, 0], sizes = [8, 256], strides = [1, 1]} : vector<72x256xf32> to vector<8x256xf32>
      %c240_i32 = arith.constant 240 : i32
      %53 = tpu.dynamic_rotate %52 by %c240_i32 dim 1 : vector<8x256xf32>, i32 -> vector<8x256xf32>
      %c7 = arith.constant 7 : index
      %c0_20 = arith.constant 0 : index
      %c0_21 = arith.constant 0 : index
      %54 = vector.load %arg4[%c7, %c0_20, %c0_21] : memref<9x1x256xf32, #tpu.memory_space<vmem>>, vector<1x1x256xf32>
      %55 = vector.shape_cast %54 : vector<1x1x256xf32> to vector<1x256xf32>
      %56 = vector.broadcast %55 : vector<1x256xf32> to vector<8x256xf32>
      %57 = arith.mulf %53, %56 : vector<8x256xf32>
      %58 = arith.addf %51, %57 : vector<8x256xf32>
      %59 = vector.extract_strided_slice %6 {offsets = [64, 0], sizes = [8, 256], strides = [1, 1]} : vector<72x256xf32> to vector<8x256xf32>
      %c239_i32 = arith.constant 239 : i32
      %60 = tpu.dynamic_rotate %59 by %c239_i32 dim 1 : vector<8x256xf32>, i32 -> vector<8x256xf32>
      %c8 = arith.constant 8 : index
      %c0_22 = arith.constant 0 : index
      %c0_23 = arith.constant 0 : index
      %61 = vector.load %arg4[%c8, %c0_22, %c0_23] : memref<9x1x256xf32, #tpu.memory_space<vmem>>, vector<1x1x256xf32>
      %62 = vector.shape_cast %61 : vector<1x1x256xf32> to vector<1x256xf32>
      %63 = vector.broadcast %62 : vector<1x256xf32> to vector<8x256xf32>
      %64 = arith.mulf %60, %63 : vector<8x256xf32>
      %65 = arith.addf %58, %64 : vector<8x256xf32>
      %66 = vector.shape_cast %65 : vector<8x256xf32> to vector<1x8x256xf32>
      %cst_24 = arith.constant dense<0.000000e+00> : vector<1xf32>
      %67 = vector.multi_reduction <add>, %66, %cst_24 [1, 2] : vector<1x8x256xf32> to vector<1xf32>
      %68 = vector.shape_cast %67 : vector<1xf32> to vector<1x1x1xf32>
      %69 = vector.extract %68[0, 0, 0] : f32 from vector<1x1x1xf32>
      %cst_25 = arith.constant 4.8828125E-4 : f32
      %70 = arith.mulf %69, %cst_25 : f32
      %71 = vector.broadcast %70 : f32 to vector<8x256xf32>
      %72 = arith.subf %65, %71 : vector<8x256xf32>
      %73 = arith.mulf %72, %72 : vector<8x256xf32>
      %74 = vector.shape_cast %73 : vector<8x256xf32> to vector<1x8x256xf32>
      %cst_26 = arith.constant dense<0.000000e+00> : vector<1xf32>
      %75 = vector.multi_reduction <add>, %74, %cst_26 [1, 2] : vector<1x8x256xf32> to vector<1xf32>
      %76 = vector.shape_cast %75 : vector<1xf32> to vector<1x1x1xf32>
      %77 = vector.extract %76[0, 0, 0] : f32 from vector<1x1x1xf32>
      %cst_27 = arith.constant 4.88519785E-4 : f32
      %78 = arith.mulf %77, %cst_27 : f32
      %79 = math.rsqrt %78 : f32
      %80 = vector.broadcast %79 : f32 to vector<8x256xf32>
      %81 = arith.mulf %72, %80 : vector<8x256xf32>
      %cst_28 = arith.constant 0.000000e+00 : f32
      %82 = vector.broadcast %cst_28 : f32 to vector<8x256xf32>
      %83 = arith.maximumf %81, %82 : vector<8x256xf32>
      %84 = arith.index_cast %arg6 : i32 to index
      %c0_29 = arith.constant 0 : index
      %c0_30 = arith.constant 0 : index
      %85 = vector.load %arg5[%84, %c0_29, %c0_30] : memref<2x8x256xf32, #tpu.memory_space<vmem>>, vector<1x8x256xf32>
      %86 = vector.shape_cast %85 : vector<1x8x256xf32> to vector<8x256xf32>
      %87 = vector.shape_cast %83 : vector<8x256xf32> to vector<1x8x256xf32>
      tpu.vector_store %arg5[%84, %c0_29, %c0_30], %87 {strides = array<i32>} : memref<2x8x256xf32, #tpu.memory_space<vmem>>, vector<1x8x256xf32>,
    }
    %c2_i32_3 = arith.constant 2 : i32
    return
  }
  func.func @transform_0(%arg0: i32) -> (i32, i32, i32) {
    %c0_i32 = arith.constant 0 : i32
    %c0_i32_0 = arith.constant 0 : i32
    %c0_i32_1 = arith.constant 0 : i32
    return %arg0, %c0_i32, %c0_i32_0 : i32, i32, i32
  }
  func.func @transform_1(%arg0: i32) -> (i32, i32) {
    %c0_i32 = arith.constant 0 : i32
    %c0_i32_0 = arith.constant 0 : i32
    %c0_i32_1 = arith.constant 0 : i32
    return %c0_i32, %c0_i32_0 : i32, i32
  }
  func.func @transform_2(%arg0: i32) -> (i32, i32) {
    %c0_i32 = arith.constant 0 : i32
    %c0_i32_0 = arith.constant 0 : i32
    %c0_i32_1 = arith.constant 0 : i32
    return %c0_i32, %c0_i32_0 : i32, i32
  }
  func.func @transform_3(%arg0: i32) -> (i32, i32, i32) {
    %c0_i32 = arith.constant 0 : i32
    %c0_i32_0 = arith.constant 0 : i32
    %c0_i32_1 = arith.constant 0 : i32
    %c0_i32_2 = arith.constant 0 : i32
    return %c0_i32, %c0_i32_0, %c0_i32_1 : i32, i32, i32
  }
  func.func @transform_4(%arg0: i32) -> (i32, i32, i32) {
    %c0_i32 = arith.constant 0 : i32
    %c0_i32_0 = arith.constant 0 : i32
    %c0_i32_1 = arith.constant 0 : i32
    return %arg0, %c0_i32, %c0_i32_0 : i32, i32, i32
  }
}

</mosaic_0001>

<llo_original>
// kernel: bn_conv2d_relu.1
$region0: #{bn_conv2d_relu.1}
  #allocation0 [shape = 'u32[]', space=smem, size = 0x4, offset = 0x4, fixed_abs, tag = 'smem constant byte address 0x4 - core index']
  #allocation1 [shape = 'u32[144,128]{1,0:T(1,128)}', space=vmem, size = 0x12000, scoped, tag = 'internal scratch']
  %s0 = inlined_call_operand.vmem [shape: f32[2,4,256], index: 0, kind: input, shape index: {}]
  %s1 = inlined_call_operand.vmem [shape: f32[72,4], index: 1, kind: input, shape index: {}]
  %s2 = inlined_call_operand.vmem [shape: f32[8,1], index: 2, kind: input, shape index: {}]
  %s3 = inlined_call_operand.vmem [shape: f32[9,1,256], index: 3, kind: input, shape index: {}]
  %s4 = inlined_call_operand.vmem [shape: f32[2,8,256], index: 4, kind: output, shape index: {}]
  %s5 = sld [smem:[#allocation0]]
  $region33: #{bn_conv2d_relu.1} parent=0
    _
  %s7 = ssub.s32 1, %s5
  %s8 = scalar_select 0, %s7, %s5
  // Predicated region
  $region2: #{bn_conv2d_relu.1} parent=0 // pred_check
    _
  $region3: #{bn_conv2d_relu.1} parent=0 // pred_check_branch
    %10 = sbr.rel (0) target = $region5
  $region4: #{bn_conv2d_relu.1} parent=0 // pred_region
    _
  $region5: #{bn_conv2d_relu.1} parent=0 // pred_fallthru
    _
  // Predicated region
  $region6: #{bn_conv2d_relu.1} parent=0 // pred_check
    _
  $region7: #{bn_conv2d_relu.1} parent=0 // pred_check_branch
    %12 = sbr.rel (0) target = $region9
  $region8: #{bn_conv2d_relu.1} parent=0 // pred_region
    _
  $region9: #{bn_conv2d_relu.1} parent=0 // pred_fallthru
    _
  // Predicated region
  $region10: #{bn_conv2d_relu.1} parent=0 // pred_check
    _
  $region11: #{bn_conv2d_relu.1} parent=0 // pred_check_branch
    %14 = sbr.rel (0) target = $region13
  $region12: #{bn_conv2d_relu.1} parent=0 // pred_region
    _
  $region13: #{bn_conv2d_relu.1} parent=0 // pred_fallthru
    _
  // Predicated region
  $region14: #{bn_conv2d_relu.1} parent=0 // pred_check
    _
  $region15: #{bn_conv2d_relu.1} parent=0 // pred_check_branch
    %16 = sbr.rel (0) target = $region17
  $region16: #{bn_conv2d_relu.1} parent=0 // pred_region
    _
  $region17: #{bn_conv2d_relu.1} parent=0 // pred_fallthru
    _
  %v17 = vld [vmem:[%s1] sm:$0xff]
  %v18 = vld [vmem:[%s1 + $0x8] sm:$0xff]
  %v19 = vld [vmem:[%s1 + $0x10] sm:$0xff]
  %v20 = vld [vmem:[%s1 + $0x18] sm:$0xff]
  %v21 = vld [vmem:[%s1 + $0x20] sm:$0xff]
  %v22 = vld [vmem:[%s1 + $0x28] sm:$0xff]
  %v23 = vld [vmem:[%s1 + $0x30] sm:$0xff]
  %v24 = vld [vmem:[%s1 + $0x38] sm:$0xff]
  %v25 = vld [vmem:[%s1 + $0x40] sm:$0xff]
  %v26 = vld [vmem:[%s2] sm:$0xff]
  loop: start=0, step=1, limit=2
  $region18: #{bn_conv2d_relu.1} parent=0 // loop_pre_header
    _
  $region19: #{bn_conv2d_relu.1} parent=0 // loop_header
    %s28 = sphi 0, %s32
    %p29 = scmp.ge.s32.totalorder %s28, 2
  $region20: #{bn_conv2d_relu.1} parent=0 // loop_header_branch
    %31 = sbr.rel (%p29) target = $region24
  $region21: #{bn_conv2d_relu.1} parent=0 // loop_body
    %s33 = smul.u32 %s28, 2
    %s34 = smul.addr %s33, 4
    %s35 = scalar_lea.vmem %s0, %s34
    %v36 = vld [vmem:[%s35] sm:$0xff]
    %v38 = vcombine.high %v36, %v36
    %vm39 = vcmask 31744
    %v41 = vsel %vm39, %v17, 0
    %v44 = vsel %vm39, %v18, 0
    %v47 = vsel %vm39, %v19, 0
    %v50 = vsel %vm39, %v20, 0
    %v53 = vsel %vm39, %v21, 0
    %v56 = vsel %vm39, %v22, 0
    %v59 = vsel %vm39, %v23, 0
    %v62 = vsel %vm39, %v24, 0
    %v65 = vsel %vm39, %v25, 0
    %vm67 = vcmask 1043456
    %v68 = vsel %vm67, %v36, 0
    %v70 = vsel %vm67, %v38, 0
    %72 = vmatprep.subr.mxu0 0.0
    %73 = vmatpush1.msra.mxu0 0.0
    %74 = vmatprep.subr.mxu0 0.0
    %75 = vmatpush1.msra.mxu0 0.0
    %76 = vmatprep.subr.mxu0 0.0
    %77 = vmatpush1.msra.mxu0 0.0
    %78 = vmatprep.subr.mxu0 0.0
    %79 = vmatpush1.msra.mxu0 0.0
    %80 = vmatprep.subr.mxu0 0.0
    %81 = vmatpush1.msra.mxu0 0.0
    %82 = vmatprep.subr.mxu0 0.0
    %83 = vmatpush1.msra.mxu0 0.0
    %84 = vmatprep.subr.mxu0 0.0
    %85 = vmatpush1.msra.mxu0 0.0
    %86 = vmatprep.subr.mxu0 0.0
    %87 = vmatpush1.msra.mxu0 0.0
    %88 = vmatprep.subr.mxu0 0.0
    %89 = vmatpush1.msra.mxu0 0.0
    %90 = vmatprep.subr.mxu0 0.0
    %91 = vmatpush1.msra.mxu0 0.0
    %92 = vmatprep.subr.mxu0 0.0
    %93 = vmatpush1.msra.mxu0 0.0
    %94 = vmatprep.subr.mxu0 0.0
    %95 = vmatpush1.msra.mxu0 0.0
    %96 = vmatprep.subr.mxu0 0.0
    %97 = vmatpush1.msra.mxu0 0.0
    %98 = vmatprep.subr.mxu0 0.0
    %99 = vmatpush1.msra.mxu0 0.0
    %100 = vmatprep.subr.mxu0 0.0
    %101 = vmatpush1.msra.mxu0 0.0
    %102 = vmatprep.subr.mxu0 %v70
    %103 = vmatpush1.msra.mxu0 %v68
    %104 = vmatprep.subr.mxu0 0.0
    %105 = vmatpush2.msra.mxu0 0.0
    %106 = vmatprep.subr.mxu0 0.0
    %107 = vmatpush2.msra.mxu0 0.0
    %108 = vmatprep.subr.mxu0 0.0
    %109 = vmatpush2.msra.mxu0 0.0
    %110 = vmatprep.subr.mxu0 0.0
    %111 = vmatpush2.msra.mxu0 0.0
    %112 = vmatprep.subr.mxu0 0.0
    %113 = vmatpush2.msra.mxu0 0.0
    %114 = vmatprep.subr.mxu0 0.0
    %115 = vmatpush2.msra.mxu0 0.0
    %116 = vmatprep.subr.mxu0 0.0
    %117 = vmatpush2.msra.mxu0 0.0
    %118 = vmatprep.subr.mxu0 0.0
    %119 = vmatpush2.msra.mxu0 0.0
    %120 = vmatprep.subr.mxu0 0.0
    %121 = vmatpush2.msra.mxu0 0.0
    %122 = vmatprep.subr.mxu0 0.0
    %123 = vmatpush2.msra.mxu0 0.0
    %124 = vmatprep.subr.mxu0 0.0
    %125 = vmatpush2.msra.mxu0 0.0
    %126 = vmatprep.subr.mxu0 0.0
    %127 = vmatpush2.msra.mxu0 0.0
    %128 = vmatprep.subr.mxu0 0.0
    %129 = vmatpush2.msra.mxu0 0.0
    %130 = vmatprep.subr.mxu0 0.0
    %131 = vmatpush2.msra.mxu0 0.0
    %132 = vmatprep.subr.mxu0 0.0
    %133 = vmatpush2.msra.mxu0 0.0
    %134 = vmatprep.subr.mxu0 0.0
    %135 = vmatpush2.msra.mxu0 0.0
    %136 = vmatprep.mubr.f32.mxu0 0.0
    %137 = vmatmul.mubr.f32.gmra.mxu0 %v41
    %v138 = vpop.f32.mrf.mxu0
    %v139 = vadd.f32 0.0, %v138
    %v140 = vpop.f32.mrf.mxu0
    %v141 = vadd.f32 0.0, %v140
    %142 = vmatprep.mubr.f32.mxu0 0.0
    %143 = vmatmul.mubr.f32.gmra.mxu0 %v44
    %v144 = vpop.f32.mrf.mxu0
    %v145 = vadd.f32 0.0, %v144
    %v146 = vpop.f32.mrf.mxu0
    %v147 = vadd.f32 0.0, %v146
    %148 = vmatprep.mubr.f32.mxu0 0.0
    %149 = vmatmul.mubr.f32.gmra.mxu0 %v47
    %v150 = vpop.f32.mrf.mxu0
    %v151 = vadd.f32 0.0, %v150
    %v152 = vpop.f32.mrf.mxu0
    %v153 = vadd.f32 0.0, %v152
    %154 = vmatprep.mubr.f32.mxu0 0.0
    %155 = vmatmul.mubr.f32.gmra.mxu0 %v50
    %v156 = vpop.f32.mrf.mxu0
    %v157 = vadd.f32 0.0, %v156
    %v158 = vpop.f32.mrf.mxu0
    %v159 = vadd.f32 0.0, %v158
    %160 = vmatprep.mubr.f32.mxu0 0.0
    %161 = vmatmul.mubr.f32.gmra.mxu0 %v53
    %v162 = vpop.f32.mrf.mxu0
    %v163 = vadd.f32 0.0, %v162
    %v164 = vpop.f32.mrf.mxu0
    %v165 = vadd.f32 0.0, %v164
    %166 = vmatprep.mubr.f32.mxu0 0.0
    %167 = vmatmul.mubr.f32.gmra.mxu0 %v56
    %v168 = vpop.f32.mrf.mxu0
    %v169 = vadd.f32 0.0, %v168
    %v170 = vpop.f32.mrf.mxu0
    %v171 = vadd.f32 0.0, %v170
    %172 = vmatprep.mubr.f32.mxu0 0.0
    %173 = vmatmul.mubr.f32.gmra.mxu0 %v59
    %v174 = vpop.f32.mrf.mxu0
    %v175 = vadd.f32 0.0, %v174
    %v176 = vpop.f32.mrf.mxu0
    %v177 = vadd.f32 0.0, %v176
    %178 = vmatprep.mubr.f32.mxu0 0.0
    %179 = vmatmul.mubr.f32.gmra.mxu0 %v62
    %v180 = vpop.f32.mrf.mxu0
    %v181 = vadd.f32 0.0, %v180
    %v182 = vpop.f32.mrf.mxu0
    %v183 = vadd.f32 0.0, %v182
    %184 = vmatprep.mubr.f32.mxu0 0.0
    %185 = vmatmul.mubr.f32.gmra.mxu0 %v65
    %v186 = vpop.f32.mrf.mxu0
    %v187 = vadd.f32 0.0, %v186
    %v188 = vpop.f32.mrf.mxu0
    %v189 = vadd.f32 0.0, %v188
    %190 = vdwg.mxu0
    %192 = vset.pattern.permute.xlu0 0
    %193 = vperm.xlu0 %192, %v26
    %v194 = vpop.permute.xlu0 %193
    %v196 = vadd.f32 %v163, %v194
    %v197 = vadd.f32 %v165, %v194
    %198 = vrot.lane.b32.xlu0 %v139, 17
    %v199 = vpop.permute.xlu0 %198
    %200 = vrot.lane.b32.xlu0 %v141, 17
    %v201 = vpop.permute.xlu0 %200
    %v202 = vlaneseq
    %v203 = vand.u32 %v202, 127
    %vm204 = vcmp.lt.s32.totalorder %v203, 17
    %v205 = vsel %vm204, %v199, %v201
    %v206 = vsel %vm204, %v201, %v199
    %v207 = vld [vmem:[%s3] sm:$0x3]
    %v209 = vlaneseq
    %v210 = vshrl.u32 %v209, 7
    %v211 = vsub.s32 0, %v210
    %v212 = vrot.slane %v207, %v211
    %v213 = vlaneseq
    %v214 = vshrl.u32 %v213, 7
    %v215 = vsub.s32 1, %v214
    %v216 = vrot.slane %v207, %v215
    %v219 = vmul.f32 %v206, %v212
    %v220 = vmul.f32 %v205, %v216
    %v221 = vadd.f32 %v196, %v219
    %v222 = vadd.f32 %v197, %v220
    %223 = vrot.lane.b32.xlu0 %v145, 16
    %v224 = vpop.permute.xlu0 %223
    %225 = vrot.lane.b32.xlu0 %v147, 16
    %v226 = vpop.permute.xlu0 %225
    %vm227 = vcmp.lt.s32.totalorder %v203, 16
    %v228 = vsel %vm227, %v224, %v226
    %v229 = vsel %vm227, %v226, %v224
    %s230 = scalar_lea.vmem %s3, 2
    %v231 = vld [vmem:[%s230] sm:$0x3]
    %v233 = vlaneseq
    %v234 = vshrl.u32 %v233, 7
    %v235 = vsub.s32 0, %v234
    %v236 = vrot.slane %v231, %v235
    %v237 = vlaneseq
    %v238 = vshrl.u32 %v237, 7
    %v239 = vsub.s32 1, %v238
    %v240 = vrot.slane %v231, %v239
    %v243 = vmul.f32 %v229, %v236
    %v244 = vmul.f32 %v228, %v240
    %v245 = vadd.f32 %v221, %v243
    %v246 = vadd.f32 %v222, %v244
    %247 = vrot.lane.b32.xlu0 %v151, 15
    %v248 = vpop.permute.xlu0 %247
    %249 = vrot.lane.b32.xlu0 %v153, 15
    %v250 = vpop.permute.xlu0 %249
    %vm251 = vcmp.lt.s32.totalorder %v203, 15
    %v252 = vsel %vm251, %v248, %v250
    %v253 = vsel %vm251, %v250, %v248
    %s254 = scalar_lea.vmem %s3, 4
    %v255 = vld [vmem:[%s254] sm:$0x3]
    %v257 = vlaneseq
    %v258 = vshrl.u32 %v257, 7
    %v259 = vsub.s32 0, %v258
    %v260 = vrot.slane %v255, %v259
    %v261 = vlaneseq
    %v262 = vshrl.u32 %v261, 7
    %v263 = vsub.s32 1, %v262
    %v264 = vrot.slane %v255, %v263
    %v267 = vmul.f32 %v253, %v260
    %v268 = vmul.f32 %v252, %v264
    %v269 = vadd.f32 %v245, %v267
    %v270 = vadd.f32 %v246, %v268
    %271 = vrot.lane.b32.xlu0 %v157, 1
    %v272 = vpop.permute.xlu0 %271
    %273 = vrot.lane.b32.xlu0 %v159, 1
    %v274 = vpop.permute.xlu0 %273
    %vm275 = vcmp.lt.s32.totalorder %v203, 1
    %v276 = vsel %vm275, %v272, %v274
    %v277 = vsel %vm275, %v274, %v272
    %s278 = scalar_lea.vmem %s3, 6
    %v279 = vld [vmem:[%s278] sm:$0x3]
    %v281 = vlaneseq
    %v282 = vshrl.u32 %v281, 7
    %v283 = vsub.s32 0, %v282
    %v284 = vrot.slane %v279, %v283
    %v285 = vlaneseq
    %v286 = vshrl.u32 %v285, 7
    %v287 = vsub.s32 1, %v286
    %v288 = vrot.slane %v279, %v287
    %v291 = vmul.f32 %v277, %v284
    %v292 = vmul.f32 %v276, %v288
    %v293 = vadd.f32 %v269, %v291
    %v294 = vadd.f32 %v270, %v292
    %295 = vrot.lane.b32.xlu0 %v169, 127
    %v296 = vpop.permute.xlu0 %295
    %297 = vrot.lane.b32.xlu0 %v171, 127
    %v298 = vpop.permute.xlu0 %297
    %vm299 = vcmp.lt.s32.totalorder %v203, 127
    %v300 = vsel %vm299, %v296, %v298
    %v301 = vsel %vm299, %v298, %v296
    %s302 = scalar_lea.vmem %s3, 10
    %v303 = vld [vmem:[%s302] sm:$0x3]
    %v305 = vlaneseq
    %v306 = vshrl.u32 %v305, 7
    %v307 = vsub.s32 0, %v306
    %v308 = vrot.slane %v303, %v307
    %v309 = vlaneseq
    %v310 = vshrl.u32 %v309, 7
    %v311 = vsub.s32 1, %v310
    %v312 = vrot.slane %v303, %v311
    %v315 = vmul.f32 %v300, %v308
    %v316 = vmul.f32 %v301, %v312
    %v317 = vadd.f32 %v293, %v315
    %v318 = vadd.f32 %v294, %v316
    %319 = vrot.lane.b32.xlu0 %v175, 113
    %v320 = vpop.permute.xlu0 %319
    %321 = vrot.lane.b32.xlu0 %v177, 113
    %v322 = vpop.permute.xlu0 %321
    %vm323 = vcmp.lt.s32.totalorder %v203, 113
    %v324 = vsel %vm323, %v320, %v322
    %v325 = vsel %vm323, %v322, %v320
    %s326 = scalar_lea.vmem %s3, 12
    %v327 = vld [vmem:[%s326] sm:$0x3]
    %v329 = vlaneseq
    %v330 = vshrl.u32 %v329, 7
    %v331 = vsub.s32 0, %v330
    %v332 = vrot.slane %v327, %v331
    %v333 = vlaneseq
    %v334 = vshrl.u32 %v333, 7
    %v335 = vsub.s32 1, %v334
    %v336 = vrot.slane %v327, %v335
    %v339 = vmul.f32 %v324, %v332
    %v340 = vmul.f32 %v325, %v336
    %v341 = vadd.f32 %v317, %v339
    %v342 = vadd.f32 %v318, %v340
    %343 = vrot.lane.b32.xlu0 %v181, 112
    %v344 = vpop.permute.xlu0 %343
    %345 = vrot.lane.b32.xlu0 %v183, 112
    %v346 = vpop.permute.xlu0 %345
    %vm347 = vcmp.lt.s32.totalorder %v203, 112
    %v348 = vsel %vm347, %v344, %v346
    %v349 = vsel %vm347, %v346, %v344
    %s350 = scalar_lea.vmem %s3, 14
    %v351 = vld [vmem:[%s350] sm:$0x3]
    %v353 = vlaneseq
    %v354 = vshrl.u32 %v353, 7
    %v355 = vsub.s32 0, %v354
    %v356 = vrot.slane %v351, %v355
    %v357 = vlaneseq
    %v358 = vshrl.u32 %v357, 7
    %v359 = vsub.s32 1, %v358
    %v360 = vrot.slane %v351, %v359
    %v363 = vmul.f32 %v348, %v356
    %v364 = vmul.f32 %v349, %v360
    %v365 = vadd.f32 %v341, %v363
    %v366 = vadd.f32 %v342, %v364
    %367 = vrot.lane.b32.xlu0 %v187, 111
    %v368 = vpop.permute.xlu0 %367
    %369 = vrot.lane.b32.xlu0 %v189, 111
    %v370 = vpop.permute.xlu0 %369
    %vm371 = vcmp.lt.s32.totalorder %v203, 111
    %v372 = vsel %vm371, %v368, %v370
    %v373 = vsel %vm371, %v370, %v368
    %s374 = scalar_lea.vmem %s3, 16
    %v375 = vld [vmem:[%s374] sm:$0x3]
    %v377 = vlaneseq
    %v378 = vshrl.u32 %v377, 7
    %v379 = vsub.s32 0, %v378
    %v380 = vrot.slane %v375, %v379
    %v381 = vlaneseq
    %v382 = vshrl.u32 %v381, 7
    %v383 = vsub.s32 1, %v382
    %v384 = vrot.slane %v375, %v383
    %v387 = vmul.f32 %v372, %v380
    %v388 = vmul.f32 %v373, %v384
    %v389 = vadd.f32 %v365, %v387
    %v390 = vadd.f32 %v366, %v388
    %v391 = vadd.f32 %v389, %v390
    %392 = vadd.xlane.f32.xlu0 %v391
    %v393 = vpop.xlane.xlu0 %392
    %v394 = vrot.slane %v393, 4
    %v395 = vadd.f32 %v393, %v394
    %v396 = vrot.slane %v395, 2
    %v397 = vadd.f32 %v395, %v396
    %v398 = vrot.slane %v397, 1
    %v399 = vadd.f32 %v397, %v398
    %s400 = vtos %v399
    %s401 = smul.f32 %s400, 0.00048828125
    %v402 = vstv %s401
    %v403 = vsub.f32 %v389, %v402
    %v404 = vsub.f32 %v390, %v402
    %v405 = vmul.f32 %v403, %v403
    %v406 = vmul.f32 %v404, %v404
    %v407 = vadd.f32 %v405, %v406
    %408 = vadd.xlane.f32.xlu0 %v407
    %v409 = vpop.xlane.xlu0 %408
    %v410 = vrot.slane %v409, 4
    %v411 = vadd.f32 %v409, %v410
    %v412 = vrot.slane %v411, 2
    %v413 = vadd.f32 %v411, %v412
    %v414 = vrot.slane %v413, 1
    %v415 = vadd.f32 %v413, %v414
    %s416 = vtos %v415
    %s417 = smul.f32 %s416, 0.0004885198
    %v418 = vstv %s417
    %v419 = vrsqrt.pop %v418
    %s420 = vtos %v419
    %v421 = vstv %s420
    %v422 = vmul.f32 %v403, %v421
    %v423 = vmul.f32 %v404, %v421
    %v424 = vmax.f32 %v422, 0.0
    %v425 = vmax.f32 %v423, 0.0
    %s426 = smul.addr %s33, 8
    %s427 = scalar_lea.vmem %s4, %s426
    %428 = vst [vmem:[%s427] sm:$0xff] %v424
    %429 = vst [vmem:[%s427 + $0x8] sm:$0xff] %v425
  $region22: #{bn_conv2d_relu.1} parent=0 // loop_footer
    %s32 = sadd.s32 1, %s28
  $region23: #{bn_conv2d_relu.1} parent=0 // loop_footer_branch
    %27 = sbr.rel target = $region19
  $region24: #{bn_conv2d_relu.1} parent=0 // loop_exit
    _
  // Predicated region
  $region25: #{bn_conv2d_relu.1} parent=0 // pred_check
    _
  $region26: #{bn_conv2d_relu.1} parent=0 // pred_check_branch
    %431 = sbr.rel (0) target = $region28
  $region27: #{bn_conv2d_relu.1} parent=0 // pred_region
    _
  $region28: #{bn_conv2d_relu.1} parent=0 // pred_fallthru
    _
  // Predicated region
  $region29: #{bn_conv2d_relu.1} parent=0 // pred_check
    _
  $region30: #{bn_conv2d_relu.1} parent=0 // pred_check_branch
    %433 = sbr.rel (0) target = $region32
  $region31: #{bn_conv2d_relu.1} parent=0 // pred_region
    _
  $region32: #{bn_conv2d_relu.1} parent=0 // pred_fallthru
    _

</llo_original>
